<compile_context>
chip_gen: v5e
topology: v5e:2x2
jax: 0.10.0
libtpu: 0.0.40
codegen_flags: <defaults>
</compile_context>

<pallas_src>
import math

import jax
import jax.numpy as jnp
from jax.experimental import pallas as pl
from jax.experimental.pallas import tpu as pltpu


def _quantization_activation_kernel(thr_ref, delta_ref, x_ref, o_ref):
    # thr_ref  : (T,)   f32 SMEM  sorted thresholds
    # delta_ref: (T+1,) f32 SMEM  [perm_ext[0], perm_ext[1]-perm_ext[0], ...]
    # x_ref / o_ref: (S, TC) tiles; every lane column is an independent
    # (batch, feature) series, normalized over the sublane (seq) axis.
    n_thresholds = thr_ref.shape[0]
    x = x_ref[...].astype(jnp.float32)
    s = x.shape[0]

    # --- first normalize_data: nan-aware mean / unbiased std over dim 0 ---------
    valid = jnp.logical_not(jnp.isnan(x))
    cnt = jnp.sum(valid.astype(jnp.float32), axis=0, keepdims=True)        # (1, TC)
    mean = jnp.sum(jnp.where(valid, x, 0.0), axis=0, keepdims=True) / cnt  # row divide
    dev = jnp.where(valid, x - mean, 0.0)
    var = jnp.sum(dev * dev, axis=0, keepdims=True) / (cnt - 1.0)          # row divide
    inv_std = 1.0 / (jnp.sqrt(var) + 1e-6)                                 # row divide (exact)
    xn = jnp.clip((x - mean) * inv_std, -100.0, 100.0)

    # --- fused quantize + class remap --------------------------------------------
    #   r = perm_ext[q],  q = #{k : xn > thr_k}   (thresholds pre-sorted in wrapper)
    # NaN inputs: every compare is False -> r = perm_ext[0], matching torch.
    r = jnp.zeros_like(xn) + delta_ref[0]
    for k in range(n_thresholds):           # T static -> unrolled cmp/select/add
        r = r + jnp.where(xn > thr_ref[k], delta_ref[k + 1], 0.0)

    # --- second normalize_data: r is always finite, so cnt == S (no NaN path) ----
    inv_n = 1.0 / s
    inv_nm1 = (1.0 / (s - 1)) if s > 1 else float("nan")
    mean_r = jnp.sum(r, axis=0, keepdims=True) * inv_n
    dev_r = r - mean_r
    var_r = jnp.sum(dev_r * dev_r, axis=0, keepdims=True) * inv_nm1
    inv_std_r = 1.0 / (jnp.sqrt(var_r) + 1e-6)                             # row divide (exact)
    o_ref[...] = jnp.clip(dev_r * inv_std_r, -100.0, 100.0).astype(o_ref.dtype)


_TARGET_TILE_BYTES = 2 * 1024 * 1024  # ~2 MiB per (S, TC) input tile


def quantization_activation(x, thresholds, perm_ext):
    """x: (S, ...) float array (normalized over dim 0). thresholds: (T,). perm_ext: (T+1,)."""
    orig_shape = x.shape
    s = int(orig_shape[0])
    cols = int(math.prod(orig_shape[1:])) if len(orig_shape) > 1 else 1
    x2d = x.reshape(s, cols)

    elem_bytes = jnp.dtype(x.dtype).itemsize
    # Lane-dense column tile sized from the ~2 MiB byte target (no artificial cap).
    target_tc = max(128, (_TARGET_TILE_BYTES // (elem_bytes * s)) // 128 * 128)
    if cols > target_tc:
        tc = target_tc                                   # multiple of 128; last block may be ragged
    elif cols >= 256:
        tc = pl.cdiv(pl.cdiv(cols, 2), 128) * 128        # >=2 steps -> dual-TC sharding on v7x
    else:
        tc = cols                                        # full-dim block for tiny inputs
    n_blocks = pl.cdiv(cols, tc)

    t = int(thresholds.shape[0])
    # Sort thresholds (the count is permutation-invariant) and build the delta table.
    thr_sorted = jnp.sort(thresholds.astype(jnp.float32))
    perm_f = perm_ext.astype(jnp.float32)
    deltas = jnp.concatenate([perm_f[:1], perm_f[1:] - perm_f[:-1]])

    n_elems = s * cols
    out = pl.pallas_call(
        _quantization_activation_kernel,
        out_shape=jax.ShapeDtypeStruct((s, cols), x.dtype),
        grid_spec=pl.GridSpec(
            grid=(n_blocks,),
            in_specs=[
                pl.BlockSpec(memory_space=pltpu.MemorySpace.SMEM),   # sorted thresholds (resident)
                pl.BlockSpec(memory_space=pltpu.MemorySpace.SMEM),   # perm delta table  (resident)
                pl.BlockSpec((s, tc), lambda j: (0, j)),
            ],
            out_specs=pl.BlockSpec((s, tc), lambda j: (0, j)),
        ),
        compiler_params=pltpu.CompilerParams(
            dimension_semantics=("parallel",),
        ),
        cost_estimate=pl.CostEstimate(
            flops=(20 + 3 * t) * n_elems,
            transcendentals=0,
            bytes_accessed=2 * elem_bytes * n_elems,
        ),
    )(thr_sorted, deltas, x2d)

    return out.reshape(orig_shape)


def _reference_forward(x, thresholds, perm_ext):
    """Pure-JAX reference with identical semantics (normalization over dim 0)."""
    def normalize(d):
        valid = jnp.logical_not(jnp.isnan(d))
        cnt = jnp.sum(valid.astype(jnp.float32), axis=0)
        mean = jnp.sum(jnp.where(valid, d, 0.0), axis=0) / cnt
        dev = jnp.where(valid, d - mean, 0.0)
        var = jnp.sum(dev * dev, axis=0) / (cnt - 1.0)
        std = jnp.sqrt(var) + 1e-6
        return jnp.clip((d - mean) / std, -100.0, 100.0)

    xn = normalize(x.astype(jnp.float32))
    q = jnp.sum((xn[..., None] > thresholds).astype(jnp.float32), axis=-1)
    t = thresholds.shape[0]
    classes = jnp.arange(t + 1, dtype=jnp.float32)
    r = jnp.sum((q[..., None] == classes).astype(jnp.float32) * perm_ext, axis=-1)
    return normalize(r)


if __name__ == "__main__":
    key = jax.random.PRNGKey(0)
    k_x, k_thr, k_perm, k_decide = jax.random.split(key, 4)

    S, B, H = 8, 2, 32          # seq=8, batch=2, hidden=32
    n_thresholds = 10
    reorder_p = 0.5

    x = jax.random.normal(k_x, (S, B, H), dtype=jnp.float32)
    thresholds = jax.random.normal(k_thr, (n_thresholds,), dtype=jnp.float32)

    # Host-side reorder decision + random class permutation (random.random() /
    # torch.randperm in the original forward), folded into a (T+1)-entry table.
    # TODO(synk): the host RNG decision itself has no in-kernel equivalent.
    do_reorder = bool(jax.random.uniform(k_decide, ()) < reorder_p)
    if do_reorder:
        perm = jax.random.permutation(k_perm, n_thresholds).astype(jnp.float32)
        perm_ext = jnp.concatenate([perm, jnp.zeros((1,), jnp.float32)])
    else:
        perm_ext = jnp.arange(n_thresholds + 1, dtype=jnp.float32)

    out = quantization_activation(x, thresholds, perm_ext)
    jax.block_until_ready(out)

    ref = _reference_forward(x, thresholds, perm_ext)
    assert out.shape == x.shape and out.dtype == x.dtype
    assert jnp.allclose(out, ref, rtol=1e-5, atol=1e-5), float(jnp.max(jnp.abs(out - ref)))

    print("KERNEL_OK")
</pallas_src>

<mosaic_0001>
module attributes {stable_mosaic.version = 11 : i64} {
  func.func @_quantization_activation_kernel(%arg0: i32, %arg1: memref<10xf32, #tpu.memory_space<smem>>, %arg2: memref<11xf32, #tpu.memory_space<smem>>, %arg3: memref<8x64xf32, #tpu.memory_space<vmem>>, %arg4: memref<8x64xf32, #tpu.memory_space<vmem>>) attributes {dimension_semantics = [#tpu.dimension_semantics<parallel>], iteration_bounds = array<i64: 1>, scalar_prefetch = 0 : i64, scratch_operands = 0 : i64, tpu.core_type = #tpu.core_type<tc>, window_params = [{transform_indices = @transform_0, window_bounds = array<i64: 10>}, {transform_indices = @transform_1, window_bounds = array<i64: 11>}, {transform_indices = @transform_2, window_bounds = array<i64: 8, 64>}, {transform_indices = @transform_3, window_bounds = array<i64: 8, 64>}]} {
    %c0 = arith.constant 0 : index
    %c0_0 = arith.constant 0 : index
    %0 = vector.load %arg3[%c0, %c0_0] : memref<8x64xf32, #tpu.memory_space<vmem>>, vector<8x64xf32>
    %1 = arith.cmpf one, %0, %0 : vector<8x64xf32>
    %cst = arith.constant dense<true> : vector<8x64xi1>
    %2 = arith.xori %1, %cst : vector<8x64xi1>
    %3 = arith.extui %2 : vector<8x64xi1> to vector<8x64xi32>
    %4 = arith.sitofp %3 : vector<8x64xi32> to vector<8x64xf32>
    %cst_1 = arith.constant dense<0.000000e+00> : vector<64xf32>
    %5 = vector.multi_reduction <add>, %4, %cst_1 [0] : vector<8x64xf32> to vector<64xf32>
    %6 = vector.shape_cast %5 : vector<64xf32> to vector<1x64xf32>
    %cst_2 = arith.constant 0.000000e+00 : f32
    %7 = vector.broadcast %cst_2 : f32 to vector<8x64xf32>
    %8 = arith.select %2, %0, %7 : vector<8x64xi1>, vector<8x64xf32>
    %cst_3 = arith.constant dense<0.000000e+00> : vector<64xf32>
    %9 = vector.multi_reduction <add>, %8, %cst_3 [0] : vector<8x64xf32> to vector<64xf32>
    %10 = vector.shape_cast %9 : vector<64xf32> to vector<1x64xf32>
    %11 = arith.divf %10, %6 : vector<1x64xf32>
    %12 = vector.broadcast %11 : vector<1x64xf32> to vector<8x64xf32>
    %13 = arith.subf %0, %12 : vector<8x64xf32>
    %cst_4 = arith.constant 0.000000e+00 : f32
    %14 = vector.broadcast %cst_4 : f32 to vector<8x64xf32>
    %15 = arith.select %2, %13, %14 : vector<8x64xi1>, vector<8x64xf32>
    %16 = arith.mulf %15, %15 : vector<8x64xf32>
    %cst_5 = arith.constant dense<0.000000e+00> : vector<64xf32>
    %17 = vector.multi_reduction <add>, %16, %cst_5 [0] : vector<8x64xf32> to vector<64xf32>
    %18 = vector.shape_cast %17 : vector<64xf32> to vector<1x64xf32>
    %cst_6 = arith.constant 1.000000e+00 : f32
    %19 = vector.broadcast %cst_6 : f32 to vector<1x64xf32>
    %20 = arith.subf %6, %19 : vector<1x64xf32>
    %21 = arith.divf %18, %20 : vector<1x64xf32>
    %22 = math.sqrt %21 : vector<1x64xf32>
    %cst_7 = arith.constant 9.99999997E-7 : f32
    %23 = vector.broadcast %cst_7 : f32 to vector<1x64xf32>
    %24 = arith.addf %22, %23 : vector<1x64xf32>
    %cst_8 = arith.constant 1.000000e+00 : f32
    %25 = vector.broadcast %cst_8 : f32 to vector<1x64xf32>
    %26 = arith.divf %25, %24 : vector<1x64xf32>
    %27 = vector.broadcast %11 : vector<1x64xf32> to vector<8x64xf32>
    %28 = arith.subf %0, %27 : vector<8x64xf32>
    %29 = vector.broadcast %26 : vector<1x64xf32> to vector<8x64xf32>
    %30 = arith.mulf %28, %29 : vector<8x64xf32>
    %cst_9 = arith.constant -1.000000e+02 : f32
    %cst_10 = arith.constant 1.000000e+02 : f32
    %31 = vector.broadcast %cst_9 : f32 to vector<8x64xf32>
    %32 = arith.maximumf %31, %30 : vector<8x64xf32>
    %33 = vector.broadcast %cst_10 : f32 to vector<8x64xf32>
    %34 = arith.minimumf %33, %32 : vector<8x64xf32>
    %cst_11 = arith.constant 0.000000e+00 : f32
    %35 = vector.broadcast %cst_11 : f32 to vector<8x64xf32>
    %c0_12 = arith.constant 0 : index
    %36 = memref.load %arg2[%c0_12] : memref<11xf32, #tpu.memory_space<smem>>
    %37 = vector.broadcast %36 : f32 to vector<8x64xf32>
    %38 = arith.addf %35, %37 : vector<8x64xf32>
    %c0_13 = arith.constant 0 : index
    %39 = memref.load %arg1[%c0_13] : memref<10xf32, #tpu.memory_space<smem>>
    %40 = vector.broadcast %39 : f32 to vector<8x64xf32>
    %41 = arith.cmpf ogt, %34, %40 : vector<8x64xf32>
    %c1 = arith.constant 1 : index
    %42 = memref.load %arg2[%c1] : memref<11xf32, #tpu.memory_space<smem>>
    %cst_14 = arith.constant 0.000000e+00 : f32
    %43 = vector.broadcast %42 : f32 to vector<8x64xf32>
    %44 = vector.broadcast %cst_14 : f32 to vector<8x64xf32>
    %45 = arith.select %41, %43, %44 : vector<8x64xi1>, vector<8x64xf32>
    %46 = arith.addf %38, %45 : vector<8x64xf32>
    %c1_15 = arith.constant 1 : index
    %47 = memref.load %arg1[%c1_15] : memref<10xf32, #tpu.memory_space<smem>>
    %48 = vector.broadcast %47 : f32 to vector<8x64xf32>
    %49 = arith.cmpf ogt, %34, %48 : vector<8x64xf32>
    %c2 = arith.constant 2 : index
    %50 = memref.load %arg2[%c2] : memref<11xf32, #tpu.memory_space<smem>>
    %cst_16 = arith.constant 0.000000e+00 : f32
    %51 = vector.broadcast %50 : f32 to vector<8x64xf32>
    %52 = vector.broadcast %cst_16 : f32 to vector<8x64xf32>
    %53 = arith.select %49, %51, %52 : vector<8x64xi1>, vector<8x64xf32>
    %54 = arith.addf %46, %53 : vector<8x64xf32>
    %c2_17 = arith.constant 2 : index
    %55 = memref.load %arg1[%c2_17] : memref<10xf32, #tpu.memory_space<smem>>
    %56 = vector.broadcast %55 : f32 to vector<8x64xf32>
    %57 = arith.cmpf ogt, %34, %56 : vector<8x64xf32>
    %c3 = arith.constant 3 : index
    %58 = memref.load %arg2[%c3] : memref<11xf32, #tpu.memory_space<smem>>
    %cst_18 = arith.constant 0.000000e+00 : f32
    %59 = vector.broadcast %58 : f32 to vector<8x64xf32>
    %60 = vector.broadcast %cst_18 : f32 to vector<8x64xf32>
    %61 = arith.select %57, %59, %60 : vector<8x64xi1>, vector<8x64xf32>
    %62 = arith.addf %54, %61 : vector<8x64xf32>
    %c3_19 = arith.constant 3 : index
    %63 = memref.load %arg1[%c3_19] : memref<10xf32, #tpu.memory_space<smem>>
    %64 = vector.broadcast %63 : f32 to vector<8x64xf32>
    %65 = arith.cmpf ogt, %34, %64 : vector<8x64xf32>
    %c4 = arith.constant 4 : index
    %66 = memref.load %arg2[%c4] : memref<11xf32, #tpu.memory_space<smem>>
    %cst_20 = arith.constant 0.000000e+00 : f32
    %67 = vector.broadcast %66 : f32 to vector<8x64xf32>
    %68 = vector.broadcast %cst_20 : f32 to vector<8x64xf32>
    %69 = arith.select %65, %67, %68 : vector<8x64xi1>, vector<8x64xf32>
    %70 = arith.addf %62, %69 : vector<8x64xf32>
    %c4_21 = arith.constant 4 : index
    %71 = memref.load %arg1[%c4_21] : memref<10xf32, #tpu.memory_space<smem>>
    %72 = vector.broadcast %71 : f32 to vector<8x64xf32>
    %73 = arith.cmpf ogt, %34, %72 : vector<8x64xf32>
    %c5 = arith.constant 5 : index
    %74 = memref.load %arg2[%c5] : memref<11xf32, #tpu.memory_space<smem>>
    %cst_22 = arith.constant 0.000000e+00 : f32
    %75 = vector.broadcast %74 : f32 to vector<8x64xf32>
    %76 = vector.broadcast %cst_22 : f32 to vector<8x64xf32>
    %77 = arith.select %73, %75, %76 : vector<8x64xi1>, vector<8x64xf32>
    %78 = arith.addf %70, %77 : vector<8x64xf32>
    %c5_23 = arith.constant 5 : index
    %79 = memref.load %arg1[%c5_23] : memref<10xf32, #tpu.memory_space<smem>>
    %80 = vector.broadcast %79 : f32 to vector<8x64xf32>
    %81 = arith.cmpf ogt, %34, %80 : vector<8x64xf32>
    %c6 = arith.constant 6 : index
    %82 = memref.load %arg2[%c6] : memref<11xf32, #tpu.memory_space<smem>>
    %cst_24 = arith.constant 0.000000e+00 : f32
    %83 = vector.broadcast %82 : f32 to vector<8x64xf32>
    %84 = vector.broadcast %cst_24 : f32 to vector<8x64xf32>
    %85 = arith.select %81, %83, %84 : vector<8x64xi1>, vector<8x64xf32>
    %86 = arith.addf %78, %85 : vector<8x64xf32>
    %c6_25 = arith.constant 6 : index
    %87 = memref.load %arg1[%c6_25] : memref<10xf32, #tpu.memory_space<smem>>
    %88 = vector.broadcast %87 : f32 to vector<8x64xf32>
    %89 = arith.cmpf ogt, %34, %88 : vector<8x64xf32>
    %c7 = arith.constant 7 : index
    %90 = memref.load %arg2[%c7] : memref<11xf32, #tpu.memory_space<smem>>
    %cst_26 = arith.constant 0.000000e+00 : f32
    %91 = vector.broadcast %90 : f32 to vector<8x64xf32>
    %92 = vector.broadcast %cst_26 : f32 to vector<8x64xf32>
    %93 = arith.select %89, %91, %92 : vector<8x64xi1>, vector<8x64xf32>
    %94 = arith.addf %86, %93 : vector<8x64xf32>
    %c7_27 = arith.constant 7 : index
    %95 = memref.load %arg1[%c7_27] : memref<10xf32, #tpu.memory_space<smem>>
    %96 = vector.broadcast %95 : f32 to vector<8x64xf32>
    %97 = arith.cmpf ogt, %34, %96 : vector<8x64xf32>
    %c8 = arith.constant 8 : index
    %98 = memref.load %arg2[%c8] : memref<11xf32, #tpu.memory_space<smem>>
    %cst_28 = arith.constant 0.000000e+00 : f32
    %99 = vector.broadcast %98 : f32 to vector<8x64xf32>
    %100 = vector.broadcast %cst_28 : f32 to vector<8x64xf32>
    %101 = arith.select %97, %99, %100 : vector<8x64xi1>, vector<8x64xf32>
    %102 = arith.addf %94, %101 : vector<8x64xf32>
    %c8_29 = arith.constant 8 : index
    %103 = memref.load %arg1[%c8_29] : memref<10xf32, #tpu.memory_space<smem>>
    %104 = vector.broadcast %103 : f32 to vector<8x64xf32>
    %105 = arith.cmpf ogt, %34, %104 : vector<8x64xf32>
    %c9 = arith.constant 9 : index
    %106 = memref.load %arg2[%c9] : memref<11xf32, #tpu.memory_space<smem>>
    %cst_30 = arith.constant 0.000000e+00 : f32
    %107 = vector.broadcast %106 : f32 to vector<8x64xf32>
    %108 = vector.broadcast %cst_30 : f32 to vector<8x64xf32>
    %109 = arith.select %105, %107, %108 : vector<8x64xi1>, vector<8x64xf32>
    %110 = arith.addf %102, %109 : vector<8x64xf32>
    %c9_31 = arith.constant 9 : index
    %111 = memref.load %arg1[%c9_31] : memref<10xf32, #tpu.memory_space<smem>>
    %112 = vector.broadcast %111 : f32 to vector<8x64xf32>
    %113 = arith.cmpf ogt, %34, %112 : vector<8x64xf32>
    %c10 = arith.constant 10 : index
    %114 = memref.load %arg2[%c10] : memref<11xf32, #tpu.memory_space<smem>>
    %cst_32 = arith.constant 0.000000e+00 : f32
    %115 = vector.broadcast %114 : f32 to vector<8x64xf32>
    %116 = vector.broadcast %cst_32 : f32 to vector<8x64xf32>
    %117 = arith.select %113, %115, %116 : vector<8x64xi1>, vector<8x64xf32>
    %118 = arith.addf %110, %117 : vector<8x64xf32>
    %cst_33 = arith.constant dense<0.000000e+00> : vector<64xf32>
    %119 = vector.multi_reduction <add>, %118, %cst_33 [0] : vector<8x64xf32> to vector<64xf32>
    %120 = vector.shape_cast %119 : vector<64xf32> to vector<1x64xf32>
    %cst_34 = arith.constant 1.250000e-01 : f32
    %121 = vector.broadcast %cst_34 : f32 to vector<1x64xf32>
    %122 = arith.mulf %120, %121 : vector<1x64xf32>
    %123 = vector.broadcast %122 : vector<1x64xf32> to vector<8x64xf32>
    %124 = arith.subf %118, %123 : vector<8x64xf32>
    %125 = arith.mulf %124, %124 : vector<8x64xf32>
    %cst_35 = arith.constant dense<0.000000e+00> : vector<64xf32>
    %126 = vector.multi_reduction <add>, %125, %cst_35 [0] : vector<8x64xf32> to vector<64xf32>
    %127 = vector.shape_cast %126 : vector<64xf32> to vector<1x64xf32>
    %cst_36 = arith.constant 0.142857149 : f32
    %128 = vector.broadcast %cst_36 : f32 to vector<1x64xf32>
    %129 = arith.mulf %127, %128 : vector<1x64xf32>
    %130 = math.sqrt %129 : vector<1x64xf32>
    %cst_37 = arith.constant 9.99999997E-7 : f32
    %131 = vector.broadcast %cst_37 : f32 to vector<1x64xf32>
    %132 = arith.addf %130, %131 : vector<1x64xf32>
    %cst_38 = arith.constant 1.000000e+00 : f32
    %133 = vector.broadcast %cst_38 : f32 to vector<1x64xf32>
    %134 = arith.divf %133, %132 : vector<1x64xf32>
    %135 = vector.broadcast %134 : vector<1x64xf32> to vector<8x64xf32>
    %136 = arith.mulf %124, %135 : vector<8x64xf32>
    %cst_39 = arith.constant -1.000000e+02 : f32
    %cst_40 = arith.constant 1.000000e+02 : f32
    %137 = vector.broadcast %cst_39 : f32 to vector<8x64xf32>
    %138 = arith.maximumf %137, %136 : vector<8x64xf32>
    %139 = vector.broadcast %cst_40 : f32 to vector<8x64xf32>
    %140 = arith.minimumf %139, %138 : vector<8x64xf32>
    %c0_41 = arith.constant 0 : index
    %c0_42 = arith.constant 0 : index
    %141 = vector.load %arg4[%c0_41, %c0_42] : memref<8x64xf32, #tpu.memory_space<vmem>>, vector<8x64xf32>
    tpu.vector_store %arg4[%c0_41, %c0_42], %140 {strides = array<i32>} : memref<8x64xf32, #tpu.memory_space<vmem>>, vector<8x64xf32>,
    return
  }
  func.func @transform_0(%arg0: i32) -> i32 {
    %c0_i32 = arith.constant 0 : i32
    %c0_i32_0 = arith.constant 0 : i32
    return %c0_i32 : i32
  }
  func.func @transform_1(%arg0: i32) -> i32 {
    %c0_i32 = arith.constant 0 : i32
    %c0_i32_0 = arith.constant 0 : i32
    return %c0_i32 : i32
  }
  func.func @transform_2(%arg0: i32) -> (i32, i32) {
    %c0_i32 = arith.constant 0 : i32
    %c0_i32_0 = arith.constant 0 : i32
    return %c0_i32, %arg0 : i32, i32
  }
  func.func @transform_3(%arg0: i32) -> (i32, i32) {
    %c0_i32 = arith.constant 0 : i32
    %c0_i32_0 = arith.constant 0 : i32
    return %c0_i32, %arg0 : i32, i32
  }
}

</mosaic_0001>

<llo_original>
// kernel: tpu_custom_call.1
$region0: #{tpu_custom_call.1}
  #allocation0 [shape = 'u32[]', space=smem, size = 0x4, offset = 0x4, fixed_abs, tag = 'smem constant byte address 0x4 - core index']
  #allocation1 [shape = 'u32[72,128]{1,0:T(1,128)}', space=vmem, size = 0x9000, scoped, tag = 'internal scratch']
  %s0 = inlined_call_operand.hbm [shape: f32[10], index: 0, kind: input, shape index: {}]
  %s1 = inlined_call_operand.hbm [shape: f32[11], index: 1, kind: input, shape index: {}]
  %s2 = inlined_call_operand.hbm [shape: f32[8,64], index: 2, kind: input, shape index: {}]
  %s3 = inlined_call_operand.hbm [shape: f32[8,64], index: 3, kind: output, shape index: {}]
  %s4 = sld [smem:[#allocation0]]
  $region34: #{tpu_custom_call.1} parent=0
    _
  %s6 = ssub.s32 1, %s4
  %s7 = scalar_select 0, %s6, %s4
  $region1: #{tpu_custom_call.1} parent=0
    #allocation2 [shape = 'u8[512]{0}', space=smem, size = 0x200, scoped, tag = 'input window, operand 0, single buffered']
    #allocation3 [shape = 's32[1]{0}', space=sflag, size = 0x4, scoped, tag = 'scoped memory for tpu_custom_call.1']
    #allocation4 [shape = 's32[1]{0}', space=sflag, size = 0x4, scoped, tag = 'scoped memory for tpu_custom_call.1']
    #allocation5 [shape = 's32[1]{0}', space=sflag, size = 0x4, scoped, tag = 'scoped memory for tpu_custom_call.1']
    #allocation6 [shape = 'u8[512]{0}', space=smem, size = 0x200, scoped, tag = 'input window, operand 1, single buffered']
    #allocation7 [shape = 's32[1]{0}', space=sflag, size = 0x4, scoped, tag = 'scoped memory for tpu_custom_call.1']
    #allocation8 [shape = 'u8[4096]{0}', space=vmem, size = 0x1000, scoped, tag = 'input window, operand 2, single buffered']
    #allocation9 [shape = 'u8[4096]{0}', space=vmem, size = 0x1000, scoped, tag = 'output window, operand 0, single buffered']
    %8 = vsyncpa [#allocation5], 0
    %9 = vsyncpa [#allocation7], 0
    %10 = vsyncpa [#allocation3], 0
    %11 = vsyncpa [#allocation4], 0
    // Predicated region
    $region2: #{tpu_custom_call.1} parent=1 // pred_check
      _
    $region3: #{tpu_custom_call.1} parent=1 // pred_check_branch
      %13 = sbr.rel (0) target = $region5
    $region4: #{tpu_custom_call.1} parent=1 // pred_region
      %15 = vsyncadd [#allocation5], 0
      %s17 = sshll.u32 %s0, 4
      %s18 = int_to_ptr.hbm [resolvable:$true] %s17
      %20 = dma.hbm_to_smem %s18, 16, [#allocation2], [#allocation5]
    $region5: #{tpu_custom_call.1} parent=1 // pred_fallthru
      _
    // Predicated region
    $region6: #{tpu_custom_call.1} parent=1 // pred_check
      _
    $region7: #{tpu_custom_call.1} parent=1 // pred_check_branch
      %22 = sbr.rel (0) target = $region9
    $region8: #{tpu_custom_call.1} parent=1 // pred_region
      %24 = vsyncadd [#allocation7], 0
      %s26 = sshll.u32 %s1, 4
      %s27 = int_to_ptr.hbm [resolvable:$true] %s26
      %29 = dma.hbm_to_smem %s27, 16, [#allocation6], [#allocation7]
    $region9: #{tpu_custom_call.1} parent=1 // pred_fallthru
      _
    // Predicated region
    $region10: #{tpu_custom_call.1} parent=1 // pred_check
      _
    $region11: #{tpu_custom_call.1} parent=1 // pred_check_branch
      %31 = sbr.rel (0) target = $region13
    $region12: #{tpu_custom_call.1} parent=1 // pred_region
      %33 = vsyncadd [#allocation3], 0
      %s35 = sshll.u32 %s2, 4
      %s36 = int_to_ptr.hbm [resolvable:$true] %s35
      %s37 = sshll.u32 [#allocation8], 4
      %s38 = int_to_ptr.vmem [resolvable:$true] %s37
      %40 = dma.hbm_to_vmem [thread:$0]  %s36, 128, %s38, [#allocation3]
    $region13: #{tpu_custom_call.1} parent=1 // pred_fallthru
      _
    // Predicated region
    $region14: #{tpu_custom_call.1} parent=1 // pred_check
      _
    $region15: #{tpu_custom_call.1} parent=1 // pred_check_branch
      %42 = sbr.rel (0) target = $region17
    $region16: #{tpu_custom_call.1} parent=1 // pred_region
      %44 = dma.done [#allocation5], 16
    $region17: #{tpu_custom_call.1} parent=1 // pred_fallthru
      _
    // Predicated region
    $region18: #{tpu_custom_call.1} parent=1 // pred_check
      _
    $region19: #{tpu_custom_call.1} parent=1 // pred_check_branch
      %46 = sbr.rel (0) target = $region21
    $region20: #{tpu_custom_call.1} parent=1 // pred_region
      %48 = dma.done [#allocation7], 16
    $region21: #{tpu_custom_call.1} parent=1 // pred_fallthru
      _
    // Predicated region
    $region22: #{tpu_custom_call.1} parent=1 // pred_check
      _
    $region23: #{tpu_custom_call.1} parent=1 // pred_check_branch
      %50 = sbr.rel (0) target = $region25
    $region24: #{tpu_custom_call.1} parent=1 // pred_region
      %52 = dma.done [#allocation3], 128
    $region25: #{tpu_custom_call.1} parent=1 // pred_fallthru
      _
    %53 = sfence
    %v54 = vld [vmem:[#allocation8] sm:$0xff]
    %vm55 = vcmp.ne.f32.partialorder %v54, %v54
    %vm56 = vmxor %vm55, 1
    %v57 = vsel %vm56, 1, 0
    %v58 = vcvt.s32.f32 %v57
    %vm59 = vcmask 523264
    %v60 = vsel %vm59, %v58, 0.0
    %v61 = vrot.slane %v60, 4
    %v62 = vadd.f32 %v60, %v61
    %v63 = vrot.slane %v62, 2
    %v64 = vadd.f32 %v62, %v63
    %v65 = vrot.slane %v64, 1
    %v66 = vadd.f32 %v64, %v65
    %v67 = vsel %vm56, %v54, 0.0
    %v68 = vsel %vm59, %v67, 0.0
    %v69 = vrot.slane %v68, 4
    %v70 = vadd.f32 %v68, %v69
    %v71 = vrot.slane %v70, 2
    %v72 = vadd.f32 %v70, %v71
    %v73 = vrot.slane %v72, 1
    %v74 = vadd.f32 %v72, %v73
    %v75 = vrcp.pop %v66
    %v76 = vmul.f32 %v66, %v75
    %v77 = vsub.f32 1.0, %v76
    %v78 = vmul.f32 %v75, %v77
    %v79 = vadd.f32 %v75, %v78
    %vm80 = vweird.f32 %v66
    %vm81 = vweird.f32 %v75
    %vm82 = vmor %vm80, %vm81
    %v83 = vsel %vm82, %v75, %v79
    %v84 = vand.u32 2147483647, %v66
    %vm85 = vcmp.eq.f32.partialorder %v84, 8.507059e+37
    %v86 = vand.u32 %v66, 2147483648
    %v87 = vor.u32 1.1754944e-38, %v86
    %v88 = vsel %vm85, %v87, %v83
    %v89 = vmul.f32 %v74, %v88
    %v90 = vsub.f32 %v54, %v89
    %v91 = vsel %vm56, %v90, 0.0
    %v92 = vmul.f32 %v91, %v91
    %v93 = vsel %vm59, %v92, 0.0
    %v94 = vrot.slane %v93, 4
    %v95 = vadd.f32 %v93, %v94
    %v96 = vrot.slane %v95, 2
    %v97 = vadd.f32 %v95, %v96
    %v98 = vrot.slane %v97, 1
    %v99 = vadd.f32 %v97, %v98
    %v100 = vsub.f32 %v66, 1.0
    %v101 = vrcp.pop %v100
    %v102 = vmul.f32 %v100, %v101
    %v103 = vsub.f32 1.0, %v102
    %v104 = vmul.f32 %v101, %v103
    %v105 = vadd.f32 %v101, %v104
    %vm106 = vweird.f32 %v100
    %vm107 = vweird.f32 %v101
    %vm108 = vmor %vm106, %vm107
    %v109 = vsel %vm108, %v101, %v105
    %v110 = vand.u32 2147483647, %v100
    %vm111 = vcmp.eq.f32.partialorder %v110, 8.507059e+37
    %v112 = vand.u32 %v100, 2147483648
    %v113 = vor.u32 1.1754944e-38, %v112
    %v114 = vsel %vm111, %v113, %v109
    %v115 = vmul.f32 %v99, %v114
    %v116 = vrsqrt.pop %v115
    %v117 = vmul.f32 %v116, %v115
    %v118 = vmul.f32 %v117, %v116
    %v119 = vmul.f32 0.5, %v118
    %v120 = vsub.f32 1.5, %v119
    %v121 = vmul.f32 %v116, %v120
    %v122 = vmul.f32 %v115, %v121
    %vm123 = vcmp.eq.f32.partialorder %v115, inf
    %v124 = vsel %vm123, %v115, %v122
    %vm125 = vcmp.eq.f32.partialorder %v115, 0.0
    %v126 = vand.u32 %v115, 2147483648
    %v127 = vsel %vm125, %v126, %v124
    %v128 = vadd.f32 %v127, 1e-06
    %v129 = vrcp.pop %v128
    %v130 = vmul.f32 %v128, %v129
    %v131 = vsub.f32 1.0, %v130
    %v132 = vmul.f32 %v129, %v131
    %v133 = vadd.f32 %v129, %v132
    %vm134 = vweird.f32 %v128
    %vm135 = vweird.f32 %v129
    %vm136 = vmor %vm134, %vm135
    %v137 = vsel %vm136, %v129, %v133
    %v138 = vand.u32 2147483647, %v128
    %vm139 = vcmp.eq.f32.partialorder %v138, 8.507059e+37
    %v140 = vand.u32 %v128, 2147483648
    %v141 = vor.u32 1.1754944e-38, %v140
    %v142 = vsel %vm139, %v141, %v137
    %v143 = vmul.f32 1.0, %v142
    %v144 = vmul.f32 %v90, %v143
    %v145 = vmax.f32 %v144, -100.0
    %v146 = vmin.f32 %v145, 100.0
    %s147 = sld [smem:[#allocation6]]
    %v148 = vstv %s147
    %v149 = vadd.f32 %v148, 0.0
    %s150 = sld [smem:[#allocation2]]
    %v151 = vstv %s150
    %vm152 = vcmp.gt.f32.partialorder %v146, %v151
    %s153 = sld [smem:[#allocation6 + $0x1]]
    %v154 = vstv %s153
    %v155 = vsel %vm152, %v154, 0.0
    %v156 = vadd.f32 %v149, %v155
    %s157 = sld [smem:[#allocation2 + $0x1]]
    %v158 = vstv %s157
    %vm159 = vcmp.gt.f32.partialorder %v146, %v158
    %s160 = sld [smem:[#allocation6 + $0x2]]
    %v161 = vstv %s160
    %v162 = vsel %vm159, %v161, 0.0
    %v163 = vadd.f32 %v156, %v162
    %s164 = sld [smem:[#allocation2 + $0x2]]
    %v165 = vstv %s164
    %vm166 = vcmp.gt.f32.partialorder %v146, %v165
    %s167 = sld [smem:[#allocation6 + $0x3]]
    %v168 = vstv %s167
    %v169 = vsel %vm166, %v168, 0.0
    %v170 = vadd.f32 %v163, %v169
    %s171 = sld [smem:[#allocation2 + $0x3]]
    %v172 = vstv %s171
    %vm173 = vcmp.gt.f32.partialorder %v146, %v172
    %s174 = sld [smem:[#allocation6 + $0x4]]
    %v175 = vstv %s174
    %v176 = vsel %vm173, %v175, 0.0
    %v177 = vadd.f32 %v170, %v176
    %s178 = sld [smem:[#allocation2 + $0x4]]
    %v179 = vstv %s178
    %vm180 = vcmp.gt.f32.partialorder %v146, %v179
    %s181 = sld [smem:[#allocation6 + $0x5]]
    %v182 = vstv %s181
    %v183 = vsel %vm180, %v182, 0.0
    %v184 = vadd.f32 %v177, %v183
    %s185 = sld [smem:[#allocation2 + $0x5]]
    %v186 = vstv %s185
    %vm187 = vcmp.gt.f32.partialorder %v146, %v186
    %s188 = sld [smem:[#allocation6 + $0x6]]
    %v189 = vstv %s188
    %v190 = vsel %vm187, %v189, 0.0
    %v191 = vadd.f32 %v184, %v190
    %s192 = sld [smem:[#allocation2 + $0x6]]
    %v193 = vstv %s192
    %vm194 = vcmp.gt.f32.partialorder %v146, %v193
    %s195 = sld [smem:[#allocation6 + $0x7]]
    %v196 = vstv %s195
    %v197 = vsel %vm194, %v196, 0.0
    %v198 = vadd.f32 %v191, %v197
    %s199 = sld [smem:[#allocation2 + $0x7]]
    %v200 = vstv %s199
    %vm201 = vcmp.gt.f32.partialorder %v146, %v200
    %s202 = sld [smem:[#allocation6 + $0x8]]
    %v203 = vstv %s202
    %v204 = vsel %vm201, %v203, 0.0
    %v205 = vadd.f32 %v198, %v204
    %s206 = sld [smem:[#allocation2 + $0x8]]
    %v207 = vstv %s206
    %vm208 = vcmp.gt.f32.partialorder %v146, %v207
    %s209 = sld [smem:[#allocation6 + $0x9]]
    %v210 = vstv %s209
    %v211 = vsel %vm208, %v210, 0.0
    %v212 = vadd.f32 %v205, %v211
    %s213 = sld [smem:[#allocation2 + $0x9]]
    %v214 = vstv %s213
    %vm215 = vcmp.gt.f32.partialorder %v146, %v214
    %s216 = sld [smem:[#allocation6 + $0xa]]
    %v217 = vstv %s216
    %v218 = vsel %vm215, %v217, 0.0
    %v219 = vadd.f32 %v212, %v218
    %v220 = vsel %vm59, %v219, 0.0
    %v221 = vrot.slane %v220, 4
    %v222 = vadd.f32 %v220, %v221
    %v223 = vrot.slane %v222, 2
    %v224 = vadd.f32 %v222, %v223
    %v225 = vrot.slane %v224, 1
    %v226 = vadd.f32 %v224, %v225
    %v227 = vmul.f32 %v226, 0.125
    %v228 = vsub.f32 %v219, %v227
    %v229 = vmul.f32 %v228, %v228
    %v230 = vsel %vm59, %v229, 0.0
    %v231 = vrot.slane %v230, 4
    %v232 = vadd.f32 %v230, %v231
    %v233 = vrot.slane %v232, 2
    %v234 = vadd.f32 %v232, %v233
    %v235 = vrot.slane %v234, 1
    %v236 = vadd.f32 %v234, %v235
    %v237 = vmul.f32 %v236, 0.14285715
    %v238 = vrsqrt.pop %v237
    %v239 = vmul.f32 %v238, %v237
    %v240 = vmul.f32 %v239, %v238
    %v241 = vmul.f32 0.5, %v240
    %v242 = vsub.f32 1.5, %v241
    %v243 = vmul.f32 %v238, %v242
    %v244 = vmul.f32 %v237, %v243
    %vm245 = vcmp.eq.f32.partialorder %v237, inf
    %v246 = vsel %vm245, %v237, %v244
    %vm247 = vcmp.eq.f32.partialorder %v237, 0.0
    %v248 = vand.u32 %v237, 2147483648
    %v249 = vsel %vm247, %v248, %v246
    %v250 = vadd.f32 %v249, 1e-06
    %v251 = vrcp.pop %v250
    %v252 = vmul.f32 %v250, %v251
    %v253 = vsub.f32 1.0, %v252
    %v254 = vmul.f32 %v251, %v253
    %v255 = vadd.f32 %v251, %v254
    %vm256 = vweird.f32 %v250
    %vm257 = vweird.f32 %v251
    %vm258 = vmor %vm256, %vm257
    %v259 = vsel %vm258, %v251, %v255
    %v260 = vand.u32 2147483647, %v250
    %vm261 = vcmp.eq.f32.partialorder %v260, 8.507059e+37
    %v262 = vand.u32 %v250, 2147483648
    %v263 = vor.u32 1.1754944e-38, %v262
    %v264 = vsel %vm261, %v263, %v259
    %v265 = vmul.f32 1.0, %v264
    %v266 = vmul.f32 %v228, %v265
    %v267 = vmax.f32 %v266, -100.0
    %v268 = vmin.f32 %v267, 100.0
    %269 = vst.msk [vmem:[#allocation9] sm:$0xff] %vm59, %v268
    // Predicated region
    $region26: #{tpu_custom_call.1} parent=1 // pred_check
      _
    $region27: #{tpu_custom_call.1} parent=1 // pred_check_branch
      %271 = sbr.rel (0) target = $region29
    $region28: #{tpu_custom_call.1} parent=1 // pred_region
      %273 = vsyncadd [#allocation4], 0
      %s275 = sshll.u32 [#allocation9], 4
      %s276 = int_to_ptr.vmem [resolvable:$true] %s275
      %s277 = sshll.u32 %s3, 4
      %s278 = int_to_ptr.hbm [resolvable:$true] %s277
      %280 = dma.vmem_to_hbm [thread:$0]  %s276, 128, %s278, [#allocation4]
    $region29: #{tpu_custom_call.1} parent=1 // pred_fallthru
      _
    // Predicated region
    $region30: #{tpu_custom_call.1} parent=1 // pred_check
      _
    $region31: #{tpu_custom_call.1} parent=1 // pred_check_branch
      %282 = sbr.rel (0) target = $region33
    $region32: #{tpu_custom_call.1} parent=1 // pred_region
      %284 = dma.done [#allocation4], 128
    $region33: #{tpu_custom_call.1} parent=1 // pred_fallthru
      _
    %285 = vsyncpa [#allocation3], 1
    %286 = vsyncpa [#allocation4], 1
    %287 = vsyncpa [#allocation5], 1
    %288 = vsyncpa [#allocation7], 1

</llo_original>
